<compile_context>
chip_gen: v6e
topology: v6e:2x2x1
jax: 0.10.0
libtpu: 0.0.40
codegen_flags: <defaults>
</compile_context>

<pallas_src>
import functools

import jax
import jax.numpy as jnp
from jax.experimental import pallas as pl
from jax.experimental.pallas import tpu as pltpu

_SUBLANE = 8
_LANE = 128


def _round_up(x, m):
    return ((x + m - 1) // m) * m


def conv_bn_relu_max_kernel(x_ref, w_ref, shift_ref, o_ref, *, l_out, cout):
    """One batch block per grid step.

    x_ref:     (b_blk, L*Cin)        bf16, channel-last input rows (lane-dense)
    w_ref:     (L*Cin, L_out*Cout)   bf16, block-banded conv weight, BN scale folded in
    shift_ref: (1, Cout)             f32,  folded shift = (bias - mean) * scale + beta
    o_ref:     (b_blk, Cout)         f32,  max over length of relu(conv_bn(x))
    """
    # Single MXU matmul produces every (length, channel) conv output for the block.
    y = jnp.dot(x_ref[...], w_ref[...], preferred_element_type=jnp.float32)

    # Max over the length axis (static lane slices of the dense N=256 result).
    m = y[:, 0:cout]
    for l in range(1, l_out):
        m = jnp.maximum(m, y[:, l * cout:(l + 1) * cout])

    # Shift + ReLU after the max (monotone + per-channel-constant shift => identical
    # to relu-then-max).  Dropout is identity in eval.
    o_ref[...] = jnp.maximum(m + shift_ref[...], 0.0).astype(o_ref.dtype)


def _choose_b_blk(B, want=2048):
    """Sublane-aligned batch block; prefer >= 2 grid steps for v7x's 2 TensorCores."""
    b_aligned = _round_up(B, _SUBLANE)
    blk = max(_SUBLANE, min(want, b_aligned))
    blk = (blk // _SUBLANE) * _SUBLANE
    if b_aligned >= 2 * _SUBLANE and -(-b_aligned // blk) < 2:
        blk = max(_SUBLANE, _round_up((b_aligned + 1) // 2, _SUBLANE))
    return blk


def convnet_forward(x, w, b, gamma, beta, run_mean, run_var,
                    eps=1e-5, stride=1, padding=2, b_blk=2048):
    """x: (B, L, Cin) float32; w: (Cout, Cin, K) Conv1d weight; returns (B, Cout)."""
    B, L, Cin = x.shape
    Cout, Cin_w, K = w.shape
    assert Cin_w == Cin
    out_dtype = x.dtype

    l_out = (L + 2 * padding - K) // stride + 1
    assert l_out >= 1

    # --- Block sizing ---------------------------------------------------------
    blk = _choose_b_blk(B, want=b_blk)
    Bp = _round_up(B, blk)

    # --- Fold conv bias + BatchNorm (inference) into weight/shift --------------
    scale = (gamma / jnp.sqrt(run_var + eps)).astype(jnp.float32)        # (Cout,)
    shift = ((b - run_mean) * scale + beta).astype(jnp.float32)          # (Cout,)

    # Block-banded weight: Wb[lp*Cin + ci, l*Cout + co] = w[co, ci, k] * scale[co]
    # with lp = l*stride + k - padding (zero outside [0, L) -> conv zero-padding).
    w_t = jnp.transpose(w, (2, 1, 0)).astype(jnp.float32)                # (K, Cin, Cout)
    w_scaled = w_t * scale[None, None, :]
    Wb = jnp.zeros((L * Cin, l_out * Cout), jnp.float32)
    for l in range(l_out):
        for k in range(K):
            lp = l * stride + k - padding
            if 0 <= lp < L:
                Wb = Wb.at[lp * Cin:(lp + 1) * Cin,
                           l * Cout:(l + 1) * Cout].set(w_scaled[k])
    Wb = Wb.astype(jnp.bfloat16)

    # --- Inputs in matmul form --------------------------------------------------
    x2 = x.reshape(B, L * Cin)                                           # free reshape
    if Bp != B:
        x2 = jnp.pad(x2, ((0, Bp - B), (0, 0)))                          # padded rows discarded
    x2 = x2.astype(jnp.bfloat16)
    shift2 = shift.reshape(1, Cout)

    kernel = functools.partial(conv_bn_relu_max_kernel, l_out=l_out, cout=Cout)

    flops = 2 * Bp * (L * Cin) * (l_out * Cout)
    bytes_accessed = (Bp * L * Cin * 2 + L * Cin * l_out * Cout * 2
                      + Cout * 4 + Bp * Cout * 4)

    out = pl.pallas_call(
        kernel,
        out_shape=jax.ShapeDtypeStruct((Bp, Cout), jnp.float32),
        grid_spec=pltpu.PrefetchScalarGridSpec(
            num_scalar_prefetch=0,
            grid=(Bp // blk,),
            in_specs=[
                pl.BlockSpec((blk, L * Cin), lambda i: (i, 0)),
                pl.BlockSpec((L * Cin, l_out * Cout), lambda i: (0, 0)),
                pl.BlockSpec((1, Cout), lambda i: (0, 0)),
            ],
            out_specs=pl.BlockSpec((blk, Cout), lambda i: (i, 0)),
        ),
        compiler_params=pltpu.CompilerParams(
            dimension_semantics=("parallel",),
        ),
        cost_estimate=pl.CostEstimate(
            flops=flops, transcendentals=0, bytes_accessed=bytes_accessed),
    )(x2, Wb, shift2)

    return out[:B, :].astype(out_dtype)


def convnet_reference(x, w, b, gamma, beta, run_mean, run_var, eps=1e-5, padding=2):
    """Pure-JAX reference mirroring the PyTorch forward (NCL conv, f32)."""
    x_ncl = jnp.transpose(x, (0, 2, 1))                    # (B, Cin, L) == x.transpose(2,1)
    y = jax.lax.conv_general_dilated(
        x_ncl, w, window_strides=(1,), padding=[(padding, padding)],
        dimension_numbers=("NCH", "OIH", "NCH"),
    )
    y = y + b[None, :, None]
    y = (y - run_mean[None, :, None]) / jnp.sqrt(run_var[None, :, None] + eps)
    y = y * gamma[None, :, None] + beta[None, :, None]
    y = jnp.maximum(y, 0.0)                                # dropout = identity (eval)
    return jnp.max(y, axis=2)


if __name__ == "__main__":
    # Small shapes consistent with the module: max_length=8, Cin=16, Cout=32, K=5.
    B, L, Cin, Cout, K = 2, 8, 16, 32, 5

    key = jax.random.PRNGKey(0)
    kx, kw, kb, kg, kbe, km, kv = jax.random.split(key, 7)

    x = jax.random.normal(kx, (B, L, Cin), dtype=jnp.float32)
    w = jax.random.normal(kw, (Cout, Cin, K), dtype=jnp.float32) * 0.1   # Conv1d weight
    b = jax.random.normal(kb, (Cout,), dtype=jnp.float32) * 0.1          # Conv1d bias
    gamma = jax.random.normal(kg, (Cout,), dtype=jnp.float32) * 0.2 + 1.0
    beta = jax.random.normal(kbe, (Cout,), dtype=jnp.float32) * 0.1
    run_mean = jax.random.normal(km, (Cout,), dtype=jnp.float32) * 0.1
    run_var = jnp.abs(jax.random.normal(kv, (Cout,), dtype=jnp.float32)) * 0.5 + 0.5

    out = convnet_forward(x, w, b, gamma, beta, run_mean, run_var)
    out = jax.block_until_ready(out)

    ref = convnet_reference(x, w, b, gamma, beta, run_mean, run_var)
    assert out.shape == (B, Cout)
    # bf16 matmul operands (f32 accumulation) -> looser tolerance than a pure-f32 check.
    assert jnp.allclose(out, ref, atol=2e-2, rtol=2e-2), "mismatch vs reference"

    print("KERNEL_OK")
</pallas_src>

<mosaic_0001>
module attributes {stable_mosaic.version = 11 : i64} {
  func.func @conv_bn_relu_max_kernel(%arg0: i32, %arg1: memref<8x128xbf16, #tpu.memory_space<vmem>>, %arg2: memref<128x256xbf16, #tpu.memory_space<vmem>>, %arg3: memref<1x32xf32, #tpu.memory_space<vmem>>, %arg4: memref<8x32xf32, #tpu.memory_space<vmem>>) attributes {dimension_semantics = [#tpu.dimension_semantics<parallel>], iteration_bounds = array<i64: 1>, scalar_prefetch = 0 : i64, scratch_operands = 0 : i64, tpu.core_type = #tpu.core_type<tc>, window_params = [{transform_indices = @transform_0, window_bounds = array<i64: 8, 128>}, {pipeline_mode = #tpu.pipeline_mode<synchronous>, transform_indices = @transform_1, window_bounds = array<i64: 128, 256>}, {pipeline_mode = #tpu.pipeline_mode<synchronous>, transform_indices = @transform_2, window_bounds = array<i64: 1, 32>}, {transform_indices = @transform_3, window_bounds = array<i64: 8, 32>}]} {
    %c0 = arith.constant 0 : index
    %c0_0 = arith.constant 0 : index
    %0 = vector.load %arg1[%c0, %c0_0] : memref<8x128xbf16, #tpu.memory_space<vmem>>, vector<8x128xbf16>
    %c0_1 = arith.constant 0 : index
    %c0_2 = arith.constant 0 : index
    %1 = vector.load %arg2[%c0_1, %c0_2] : memref<128x256xbf16, #tpu.memory_space<vmem>>, vector<128x256xbf16>
    %cst = arith.constant dense<0.000000e+00> : vector<8x256xf32>
    %2 = tpu.matmul %0, %1, %cst {dimension_numbers = #tpu.dot_dimension_numbers<[1], [0], [0], [1], [0, 0, 1, 1], [], []>} : vector<8x128xbf16>, vector<128x256xbf16>, vector<8x256xf32> -> vector<8x256xf32>
    %3 = vector.extract_strided_slice %2 {offsets = [0, 0], sizes = [8, 32], strides = [1, 1]} : vector<8x256xf32> to vector<8x32xf32>
    %4 = vector.extract_strided_slice %2 {offsets = [0, 32], sizes = [8, 32], strides = [1, 1]} : vector<8x256xf32> to vector<8x32xf32>
    %5 = arith.maximumf %3, %4 : vector<8x32xf32>
    %6 = vector.extract_strided_slice %2 {offsets = [0, 64], sizes = [8, 32], strides = [1, 1]} : vector<8x256xf32> to vector<8x32xf32>
    %7 = arith.maximumf %5, %6 : vector<8x32xf32>
    %8 = vector.extract_strided_slice %2 {offsets = [0, 96], sizes = [8, 32], strides = [1, 1]} : vector<8x256xf32> to vector<8x32xf32>
    %9 = arith.maximumf %7, %8 : vector<8x32xf32>
    %10 = vector.extract_strided_slice %2 {offsets = [0, 128], sizes = [8, 32], strides = [1, 1]} : vector<8x256xf32> to vector<8x32xf32>
    %11 = arith.maximumf %9, %10 : vector<8x32xf32>
    %12 = vector.extract_strided_slice %2 {offsets = [0, 160], sizes = [8, 32], strides = [1, 1]} : vector<8x256xf32> to vector<8x32xf32>
    %13 = arith.maximumf %11, %12 : vector<8x32xf32>
    %14 = vector.extract_strided_slice %2 {offsets = [0, 192], sizes = [8, 32], strides = [1, 1]} : vector<8x256xf32> to vector<8x32xf32>
    %15 = arith.maximumf %13, %14 : vector<8x32xf32>
    %16 = vector.extract_strided_slice %2 {offsets = [0, 224], sizes = [8, 32], strides = [1, 1]} : vector<8x256xf32> to vector<8x32xf32>
    %17 = arith.maximumf %15, %16 : vector<8x32xf32>
    %c0_3 = arith.constant 0 : index
    %c0_4 = arith.constant 0 : index
    %18 = vector.load %arg3[%c0_3, %c0_4] : memref<1x32xf32, #tpu.memory_space<vmem>>, vector<1x32xf32>
    %19 = vector.broadcast %18 : vector<1x32xf32> to vector<8x32xf32>
    %20 = arith.addf %17, %19 : vector<8x32xf32>
    %cst_5 = arith.constant 0.000000e+00 : f32
    %21 = vector.broadcast %cst_5 : f32 to vector<8x32xf32>
    %22 = arith.maximumf %20, %21 : vector<8x32xf32>
    %c0_6 = arith.constant 0 : index
    %c0_7 = arith.constant 0 : index
    %23 = vector.load %arg4[%c0_6, %c0_7] : memref<8x32xf32, #tpu.memory_space<vmem>>, vector<8x32xf32>
    tpu.vector_store %arg4[%c0_6, %c0_7], %22 {strides = array<i32>} : memref<8x32xf32, #tpu.memory_space<vmem>>, vector<8x32xf32>,
    return
  }
  func.func @transform_0(%arg0: i32) -> (i32, i32) {
    %c0_i32 = arith.constant 0 : i32
    %c0_i32_0 = arith.constant 0 : i32
    return %arg0, %c0_i32 : i32, i32
  }
  func.func @transform_1(%arg0: i32) -> (i32, i32) {
    %c0_i32 = arith.constant 0 : i32
    %c0_i32_0 = arith.constant 0 : i32
    %c0_i32_1 = arith.constant 0 : i32
    return %c0_i32, %c0_i32_0 : i32, i32
  }
  func.func @transform_2(%arg0: i32) -> (i32, i32) {
    %c0_i32 = arith.constant 0 : i32
    %c0_i32_0 = arith.constant 0 : i32
    %c0_i32_1 = arith.constant 0 : i32
    return %c0_i32, %c0_i32_0 : i32, i32
  }
  func.func @transform_3(%arg0: i32) -> (i32, i32) {
    %c0_i32 = arith.constant 0 : i32
    %c0_i32_0 = arith.constant 0 : i32
    return %arg0, %c0_i32 : i32, i32
  }
}

</mosaic_0001>

<llo_original>
// kernel: tpu_custom_call.1
$region0: #{tpu_custom_call.1}
  #allocation0 [shape = 'u32[]', space=smem, size = 0x4, offset = 0x4, fixed_abs, tag = 'smem constant byte address 0x4 - core index']
  #allocation1 [shape = 'u32[144,128]{1,0:T(1,128)}', space=vmem, size = 0x12000, scoped, tag = 'internal scratch']
  %s0 = inlined_call_operand.hbm [shape: bf16[8,128], index: 0, kind: input, shape index: {}]
  %s1 = inlined_call_operand.hbm [shape: bf16[128,256], index: 1, kind: input, shape index: {}]
  %s2 = inlined_call_operand.vmem [shape: f32[1,32], index: 2, kind: input, shape index: {}]
  %s3 = inlined_call_operand.hbm [shape: f32[8,32], index: 3, kind: output, shape index: {}]
  %s4 = sld [smem:[#allocation0]]
  $region30: #{tpu_custom_call.1} parent=0
    _
  %s6 = ssub.s32 1, %s4
  %s7 = scalar_select 0, %s6, %s4
  $region1: #{tpu_custom_call.1} parent=0
    #allocation2 [shape = 'u8[2048]{0}', space=vmem, size = 0x800, scoped, tag = 'input window, operand 0, single buffered']
    #allocation3 [shape = 's32[1]{0}', space=sflag, size = 0x4, scoped, tag = 'scoped memory for tpu_custom_call.1']
    #allocation4 [shape = 's32[1]{0}', space=sflag, size = 0x4, scoped, tag = 'scoped memory for tpu_custom_call.1']
    #allocation5 [shape = 'u8[65536]{0}', space=vmem, size = 0x10000, scoped, tag = 'input window, operand 1, single buffered']
    #allocation6 [shape = 's32[1]{0}', space=sflag, size = 0x4, scoped, tag = 'scoped memory for tpu_custom_call.1']
    #allocation7 [shape = 'u8[4096]{0}', space=vmem, size = 0x1000, scoped, tag = 'output window, operand 0, single buffered']
    %8 = vsyncpa [#allocation3], 0
    %9 = vsyncpa [#allocation6], 0
    %10 = vsyncpa [#allocation4], 0
    // Predicated region
    $region2: #{tpu_custom_call.1} parent=1 // pred_check
      _
    $region3: #{tpu_custom_call.1} parent=1 // pred_check_branch
      %12 = sbr.rel (0) target = $region5
    $region4: #{tpu_custom_call.1} parent=1 // pred_region
      %s14 = ssub.s32 64, 64
      %15 = vsyncadd [#allocation3], %s14
      %s17 = sshll.u32 [#allocation2], 4
      %s18 = int_to_ptr.vmem [resolvable:$true] %s17
      %20 = dma.hbm_to_vmem [thread:$0]  %s0, 64, %s18, [#allocation3]
    $region5: #{tpu_custom_call.1} parent=1 // pred_fallthru
      _
    // Predicated region
    $region6: #{tpu_custom_call.1} parent=1 // pred_check
      _
    $region7: #{tpu_custom_call.1} parent=1 // pred_check_branch
      %22 = sbr.rel (0) target = $region9
    $region8: #{tpu_custom_call.1} parent=1 // pred_region
      %s24 = ssub.s32 2048, 2048
      %25 = vsyncadd [#allocation6], %s24
      %s26 = sshll.u32 [#allocation5], 4
      %s27 = int_to_ptr.vmem [resolvable:$true] %s26
      %32 = dma.hbm_to_vmem [thread:$0]  %s1, 2048, %s27, [#allocation6], 128, 128, 8
    $region9: #{tpu_custom_call.1} parent=1 // pred_fallthru
      _
    // Predicated region
    $region10: #{tpu_custom_call.1} parent=1 // pred_check
      _
    $region11: #{tpu_custom_call.1} parent=1 // pred_check_branch
      %34 = sbr.rel (0) target = $region13
    $region12: #{tpu_custom_call.1} parent=1 // pred_region
      _
    $region13: #{tpu_custom_call.1} parent=1 // pred_fallthru
      _
    // Predicated region
    $region14: #{tpu_custom_call.1} parent=1 // pred_check
      _
    $region15: #{tpu_custom_call.1} parent=1 // pred_check_branch
      %36 = sbr.rel (0) target = $region17
    $region16: #{tpu_custom_call.1} parent=1 // pred_region
      %37 = dma.done [#allocation3], 64
    $region17: #{tpu_custom_call.1} parent=1 // pred_fallthru
      _
    // Predicated region
    $region18: #{tpu_custom_call.1} parent=1 // pred_check
      _
    $region19: #{tpu_custom_call.1} parent=1 // pred_check_branch
      %39 = sbr.rel (0) target = $region21
    $region20: #{tpu_custom_call.1} parent=1 // pred_region
      %40 = dma.done [#allocation6], 2048
    $region21: #{tpu_custom_call.1} parent=1 // pred_fallthru
      _
    %v42 = vld [vmem:[#allocation2] sm:$0xf]
    %v43 = vld [vmem:[#allocation5] sm:$0xff]
    %v44 = vld [vmem:[#allocation5 + $0x8] sm:$0xff]
    %v45 = vld [vmem:[#allocation5 + $0x10] sm:$0xff]
    %v46 = vld [vmem:[#allocation5 + $0x18] sm:$0xff]
    %v47 = vld [vmem:[#allocation5 + $0x20] sm:$0xff]
    %v48 = vld [vmem:[#allocation5 + $0x28] sm:$0xff]
    %v49 = vld [vmem:[#allocation5 + $0x30] sm:$0xff]
    %v50 = vld [vmem:[#allocation5 + $0x38] sm:$0xff]
    %v51 = vld [vmem:[#allocation5 + $0x40] sm:$0xff]
    %v52 = vld [vmem:[#allocation5 + $0x48] sm:$0xff]
    %v53 = vld [vmem:[#allocation5 + $0x50] sm:$0xff]
    %v54 = vld [vmem:[#allocation5 + $0x58] sm:$0xff]
    %v55 = vld [vmem:[#allocation5 + $0x60] sm:$0xff]
    %v56 = vld [vmem:[#allocation5 + $0x68] sm:$0xff]
    %v57 = vld [vmem:[#allocation5 + $0x70] sm:$0xff]
    %v58 = vld [vmem:[#allocation5 + $0x78] sm:$0xff]
    %v75 = vunpack.c.l.b16 %v43
    %v76 = vunpack.c.h.b16 %v43
    %v77 = vunpack.c.l.b16 %v44
    %v78 = vunpack.c.h.b16 %v44
    %v79 = vunpack.c.l.b16 %v45
    %v80 = vunpack.c.h.b16 %v45
    %v81 = vunpack.c.l.b16 %v46
    %v82 = vunpack.c.h.b16 %v46
    %v83 = vunpack.c.l.b16 %v47
    %v84 = vunpack.c.h.b16 %v47
    %v85 = vunpack.c.l.b16 %v48
    %v86 = vunpack.c.h.b16 %v48
    %v87 = vunpack.c.l.b16 %v49
    %v88 = vunpack.c.h.b16 %v49
    %v89 = vunpack.c.l.b16 %v50
    %v90 = vunpack.c.h.b16 %v50
    %v91 = vunpack.c.l.b16 %v51
    %v92 = vunpack.c.h.b16 %v51
    %v93 = vunpack.c.l.b16 %v52
    %v94 = vunpack.c.h.b16 %v52
    %v95 = vunpack.c.l.b16 %v53
    %v96 = vunpack.c.h.b16 %v53
    %v97 = vunpack.c.l.b16 %v54
    %v98 = vunpack.c.h.b16 %v54
    %v99 = vunpack.c.l.b16 %v55
    %v100 = vunpack.c.h.b16 %v55
    %v101 = vunpack.c.l.b16 %v56
    %v102 = vunpack.c.h.b16 %v56
    %v103 = vunpack.c.l.b16 %v57
    %v104 = vunpack.c.h.b16 %v57
    %v105 = vunpack.c.l.b16 %v58
    %v106 = vunpack.c.h.b16 %v58
    %v107 = vpack.c.b16 %v77, %v75
    %v108 = vpack.c.b16 %v78, %v76
    %v109 = vpack.c.b16 %v81, %v79
    %v110 = vpack.c.b16 %v82, %v80
    %v111 = vpack.c.b16 %v85, %v83
    %v112 = vpack.c.b16 %v86, %v84
    %v113 = vpack.c.b16 %v89, %v87
    %v114 = vpack.c.b16 %v90, %v88
    %v115 = vpack.c.b16 %v93, %v91
    %v116 = vpack.c.b16 %v94, %v92
    %v117 = vpack.c.b16 %v97, %v95
    %v118 = vpack.c.b16 %v98, %v96
    %v119 = vpack.c.b16 %v101, %v99
    %v120 = vpack.c.b16 %v102, %v100
    %v121 = vpack.c.b16 %v105, %v103
    %v122 = vpack.c.b16 %v106, %v104
    %139 = vmatprep.subr.bf16.mxu0 %v122
    %140 = vmatpush1.bf16.msra.mxu0 %v121
    %141 = vmatprep.subr.bf16.mxu0 %v120
    %142 = vmatpush1.bf16.msra.mxu0 %v119
    %143 = vmatprep.subr.bf16.mxu0 %v118
    %144 = vmatpush1.bf16.msra.mxu0 %v117
    %145 = vmatprep.subr.bf16.mxu0 %v116
    %146 = vmatpush1.bf16.msra.mxu0 %v115
    %147 = vmatprep.subr.bf16.mxu0 %v114
    %148 = vmatpush1.bf16.msra.mxu0 %v113
    %149 = vmatprep.subr.bf16.mxu0 %v112
    %150 = vmatpush1.bf16.msra.mxu0 %v111
    %151 = vmatprep.subr.bf16.mxu0 %v110
    %152 = vmatpush1.bf16.msra.mxu0 %v109
    %153 = vmatprep.subr.bf16.mxu0 %v108
    %154 = vmatpush1.bf16.msra.mxu0 %v107
    %155 = vmatprep.subr.bf16.mxu0 0
    %156 = vmatpush2.bf16.msra.mxu0 0
    %157 = vmatprep.subr.bf16.mxu0 0
    %158 = vmatpush2.bf16.msra.mxu0 0
    %159 = vmatprep.subr.bf16.mxu0 0
    %160 = vmatpush2.bf16.msra.mxu0 0
    %161 = vmatprep.subr.bf16.mxu0 0
    %162 = vmatpush2.bf16.msra.mxu0 0
    %163 = vmatprep.subr.bf16.mxu0 0
    %164 = vmatpush2.bf16.msra.mxu0 0
    %165 = vmatprep.subr.bf16.mxu0 0
    %166 = vmatpush2.bf16.msra.mxu0 0
    %167 = vmatprep.subr.bf16.mxu0 0
    %168 = vmatpush2.bf16.msra.mxu0 0
    %169 = vmatprep.subr.bf16.mxu0 0
    %170 = vmatpush2.bf16.msra.mxu0 0
    %171 = vmatprep.mubr.bf16.mxu0 0
    %172 = vmatmul.mubr.bf16.gmra.mxu0 %v42
    %v173 = vpop.f32.mrf.mxu0
    %v174 = vadd.f32 0.0, %v173
    %v175 = vpop.f32.mrf.mxu0
    %v176 = vadd.f32 0.0, %v175
    %v177 = vpop.f32.mrf.mxu0
    %v178 = vpop.f32.mrf.mxu0
    %179 = vdwg.mxu0
    %181 = vrot.lane.b32.xlu0 %v174, 96
    %v182 = vpop.permute.xlu0 %181
    %v184 = vmax.f32 %v174, %v182
    %185 = vrot.lane.b32.xlu0 %v174, 64
    %v186 = vpop.permute.xlu0 %185
    %v188 = vmax.f32 %v184, %v186
    %189 = vrot.lane.b32.xlu0 %v174, 32
    %v190 = vpop.permute.xlu0 %189
    %v192 = vmax.f32 %v188, %v190
    %v193 = vmax.f32 %v192, %v176
    %195 = vrot.lane.b32.xlu0 %v176, 96
    %v196 = vpop.permute.xlu0 %195
    %v198 = vmax.f32 %v193, %v196
    %199 = vrot.lane.b32.xlu0 %v176, 64
    %v200 = vpop.permute.xlu0 %199
    %v202 = vmax.f32 %v198, %v200
    %203 = vrot.lane.b32.xlu0 %v176, 32
    %v204 = vpop.permute.xlu0 %203
    %v206 = vmax.f32 %v202, %v204
    %v207 = vld [vmem:[%s2] sm:$0x1]
    %v209 = vlaneseq
    %v210 = vshrl.u32 %v209, 7
    %v211 = vsub.s32 0, %v210
    %v212 = vrot.slane %v207, %v211
    %v214 = vadd.f32 %v206, %v212
    %v215 = vmax.f32 %v214, 0.0
    %vm216 = vcmask 261120
    %217 = vst.msk [vmem:[#allocation7] sm:$0xff] %vm216, %v215
    // Predicated region
    $region22: #{tpu_custom_call.1} parent=1 // pred_check
      _
    $region23: #{tpu_custom_call.1} parent=1 // pred_check_branch
      %219 = sbr.rel (0) target = $region25
    $region24: #{tpu_custom_call.1} parent=1 // pred_region
      %s221 = ssub.s32 128, 128
      %222 = vsyncadd [#allocation4], %s221
      %s224 = sshll.u32 [#allocation7], 4
      %s225 = int_to_ptr.vmem [resolvable:$true] %s224
      %227 = dma.vmem_to_hbm [thread:$0]  %s225, 128, %s3, [#allocation4]
    $region25: #{tpu_custom_call.1} parent=1 // pred_fallthru
      _
    // Predicated region
    $region26: #{tpu_custom_call.1} parent=1 // pred_check
      _
    $region27: #{tpu_custom_call.1} parent=1 // pred_check_branch
      %229 = sbr.rel (0) target = $region29
    $region28: #{tpu_custom_call.1} parent=1 // pred_region
      %230 = dma.done [#allocation4], 128
    $region29: #{tpu_custom_call.1} parent=1 // pred_fallthru
      _
    %231 = vsyncpa [#allocation3], 1
    %232 = vsyncpa [#allocation6], 1
    %233 = vsyncpa [#allocation4], 1

</llo_original>
